<compile_context>
chip_gen: v7x
topology: tpu7x:2x2x1
jax: 0.10.0
libtpu: 0.0.40
codegen_flags: <defaults>
</compile_context>

<pallas_src>
import jax
import jax.numpy as jnp
import numpy as np
from jax.experimental import pallas as pl
from jax.experimental.pallas import tpu as pltpu


def _round_up(x, m):
    return ((x + m - 1) // m) * m


def clock_linear_kernel(xm_ref, w_ref, b_ref, pred_ref):
    # xm_ref   : (TM, n_feat)   aligned feature row tile (one "batch")
    # w_ref    : (n_feat, 128)  clock weights; real weights in lane 0, rest 0
    # b_ref    : (1, 1)         clock bias (SMEM scalar)
    # pred_ref : (TM, 128)      lane-dense prediction tile; lane 0 = prediction
    pred_ref[...] = (
        jnp.dot(xm_ref[...], w_ref[...], preferred_element_type=jnp.float32)
        + b_ref[0, 0]
    )


def predictor_forward(x, feature_idx, w, b, *, batch_size=1024, row_tile=512):
    """Feature alignment + batched linear clock model.

    x           : (n_obs, n_var) float32  -- adata.X
    feature_idx : (n_feat,)      int32    -- source column per model feature;
                                             missing features point at n_var
                                             (an appended all-zero column)
    w           : (n_feat, 1)    float32  -- linear clock weights
    b           : (1, 1)         float32  -- linear clock bias
    Returns (X_model, predictions) = ((n_obs, n_feat), (n_obs, 1)).

    Note: `batch_size` is kept for signature parity with the PyTorch module;
    the kernel row tile is decoupled from it (the model is linear and batch
    predictions are simply concatenated, so the result is identical).
    """
    del batch_size  # tiling decoupled from dataloader batch size (see note)
    x = jnp.asarray(x, jnp.float32)
    n_obs, n_var = x.shape
    n_feat = int(feature_idx.shape[0])

    # --- check_features_in_adata: column gather with zero-fill for missing ---
    x_aug = jnp.concatenate([x, jnp.zeros((n_obs, 1), x.dtype)], axis=1)
    x_model = jnp.take(x_aug, jnp.asarray(feature_idx, jnp.int32), axis=1)

    # --- forward: batched linear clock over row tiles (Pallas kernel) ---
    tm = min(row_tile, _round_up(n_obs, 8))
    n_pad = _round_up(n_obs, tm)
    xm_pad = (
        x_model if n_pad == n_obs
        else jnp.pad(x_model, ((0, n_pad - n_obs), (0, 0)))
    )

    # Lane-dense weights/outputs: real weights in lane 0, lanes 1..127 zero.
    w_wide = (
        jnp.zeros((n_feat, 128), jnp.float32)
        .at[:, 0]
        .set(jnp.asarray(w, jnp.float32).reshape(n_feat))
    )
    b_smem = jnp.asarray(b, jnp.float32).reshape(1, 1)

    grid = (n_pad // tm,)
    preds_wide = pl.pallas_call(
        clock_linear_kernel,
        out_shape=jax.ShapeDtypeStruct((n_pad, 128), jnp.float32),
        grid_spec=pltpu.PrefetchScalarGridSpec(
            num_scalar_prefetch=0,
            grid=grid,
            in_specs=[
                pl.BlockSpec((tm, n_feat), lambda i: (i, 0)),        # X_model tile
                pl.BlockSpec((n_feat, 128), lambda i: (0, 0)),       # weights
                pl.BlockSpec(memory_space=pltpu.MemorySpace.SMEM),   # bias scalar
            ],
            out_specs=pl.BlockSpec((tm, 128), lambda i: (i, 0)),
        ),
        compiler_params=pltpu.CompilerParams(
            dimension_semantics=("parallel",),
        ),
    )(xm_pad, w_wide, b_smem)

    predictions = preds_wide[:n_obs, :1]   # drop padded rows + padding lanes
    return x_model, predictions


def build_feature_index(adata_var_names, model_features, n_var):
    """Mirror of check_features_in_adata's index bookkeeping (plain numpy)."""
    feature_indices = {f: i for i, f in enumerate(adata_var_names)}
    model_feature_indices = np.array(
        [feature_indices.get(f, -1) for f in model_features], dtype=np.int64
    )
    missing_mask = model_feature_indices == -1
    # Missing features gather from the appended all-zero column (index n_var).
    idx = np.where(missing_mask, n_var, model_feature_indices).astype(np.int32)
    percent_missing = 100.0 * missing_mask.sum() / len(model_features)
    return idx, missing_mask, percent_missing


if __name__ == "__main__":
    # Small synthetic "adata": 16 observations x 32 genes; a linear clock model
    # with 24 features, exactly 4 of which are absent from adata var_names.
    n_obs, n_var, n_feat, batch_size = 16, 32, 24, 8

    adata_var_names = [f"gene_{i}" for i in range(n_var)]
    model_features = [f"gene_{j}" for j in range(n_feat - 4)] + [
        f"missing_{k}" for k in range(4)
    ]

    key = jax.random.PRNGKey(0)
    kx, kw, kb = jax.random.split(key, 3)
    x = jax.random.normal(kx, (n_obs, n_var), dtype=jnp.float32)       # adata.X
    w = jax.random.normal(kw, (n_feat, 1), dtype=jnp.float32) * 0.1    # clock weights
    b = jax.random.normal(kb, (1, 1), dtype=jnp.float32)               # clock bias

    feature_idx, missing_mask, percent_missing = build_feature_index(
        adata_var_names, model_features, n_var
    )

    x_model, predictions = predictor_forward(
        x, feature_idx, w, b, batch_size=batch_size
    )
    jax.block_until_ready(predictions)

    # Pure-numpy reference (same semantics: gather/zero-fill, then linear).
    x_np = np.asarray(x)
    x_aug_np = np.concatenate([x_np, np.zeros((n_obs, 1), np.float32)], axis=1)
    x_model_ref = x_aug_np[:, feature_idx]
    pred_ref = x_model_ref @ np.asarray(w) + np.asarray(b)

    np.testing.assert_allclose(np.asarray(x_model), x_model_ref,
                               rtol=1e-5, atol=1e-5)
    np.testing.assert_allclose(np.asarray(predictions), pred_ref,
                               rtol=1e-5, atol=1e-5)
    assert predictions.shape == (n_obs, 1)
    assert abs(percent_missing - 100.0 * 4 / n_feat) < 1e-9

    print("KERNEL_OK")
</pallas_src>

<mosaic_0001>
module attributes {stable_mosaic.version = 11 : i64} {
  func.func @clock_linear_kernel(%arg0: i32, %arg1: memref<16x24xf32, #tpu.memory_space<vmem>>, %arg2: memref<24x128xf32, #tpu.memory_space<vmem>>, %arg3: memref<1x1xf32, #tpu.memory_space<smem>>, %arg4: memref<16x128xf32, #tpu.memory_space<vmem>>) attributes {dimension_semantics = [#tpu.dimension_semantics<parallel>], iteration_bounds = array<i64: 1>, scalar_prefetch = 0 : i64, scratch_operands = 0 : i64, tpu.core_type = #tpu.core_type<tc>, window_params = [{transform_indices = @transform_0, window_bounds = array<i64: 16, 24>}, {pipeline_mode = #tpu.pipeline_mode<synchronous>, transform_indices = @transform_1, window_bounds = array<i64: 24, 128>}, {transform_indices = @transform_2, window_bounds = array<i64: 1, 1>}, {transform_indices = @transform_3, window_bounds = array<i64: 16, 128>}]} {
    %c0 = arith.constant 0 : index
    %c0_0 = arith.constant 0 : index
    %0 = vector.load %arg1[%c0, %c0_0] : memref<16x24xf32, #tpu.memory_space<vmem>>, vector<16x24xf32>
    %c0_1 = arith.constant 0 : index
    %c0_2 = arith.constant 0 : index
    %1 = vector.load %arg2[%c0_1, %c0_2] : memref<24x128xf32, #tpu.memory_space<vmem>>, vector<24x128xf32>
    %cst = arith.constant dense<0.000000e+00> : vector<16x128xf32>
    %2 = tpu.matmul %0, %1, %cst {dimension_numbers = #tpu.dot_dimension_numbers<[1], [0], [0], [1], [0, 0, 1, 1], [], []>} : vector<16x24xf32>, vector<24x128xf32>, vector<16x128xf32> -> vector<16x128xf32>
    %c0_3 = arith.constant 0 : index
    %c0_4 = arith.constant 0 : index
    %3 = memref.load %arg3[%c0_3, %c0_4] : memref<1x1xf32, #tpu.memory_space<smem>>
    %4 = vector.broadcast %3 : f32 to vector<16x128xf32>
    %5 = arith.addf %2, %4 : vector<16x128xf32>
    %c0_5 = arith.constant 0 : index
    %c0_6 = arith.constant 0 : index
    %6 = vector.load %arg4[%c0_5, %c0_6] : memref<16x128xf32, #tpu.memory_space<vmem>>, vector<16x128xf32>
    tpu.vector_store %arg4[%c0_5, %c0_6], %5 {strides = array<i32>} : memref<16x128xf32, #tpu.memory_space<vmem>>, vector<16x128xf32>,
    return
  }
  func.func @transform_0(%arg0: i32) -> (i32, i32) {
    %c0_i32 = arith.constant 0 : i32
    %c0_i32_0 = arith.constant 0 : i32
    return %arg0, %c0_i32 : i32, i32
  }
  func.func @transform_1(%arg0: i32) -> (i32, i32) {
    %c0_i32 = arith.constant 0 : i32
    %c0_i32_0 = arith.constant 0 : i32
    %c0_i32_1 = arith.constant 0 : i32
    return %c0_i32, %c0_i32_0 : i32, i32
  }
  func.func @transform_2(%arg0: i32) -> (i32, i32) {
    %c0_i32 = arith.constant 0 : i32
    %c0_i32_0 = arith.constant 0 : i32
    %c0_i32_1 = arith.constant 0 : i32
    return %c0_i32, %c0_i32_0 : i32, i32
  }
  func.func @transform_3(%arg0: i32) -> (i32, i32) {
    %c0_i32 = arith.constant 0 : i32
    %c0_i32_0 = arith.constant 0 : i32
    return %arg0, %c0_i32 : i32, i32
  }
}

</mosaic_0001>

<llo_original>
// kernel: tpu_custom_call.1
$region0: #{tpu_custom_call.1}
  #allocation0 [shape = 'u32[]', space=smem, size = 0x4, offset = 0x4, fixed_abs, tag = 'smem constant byte address 0x4 - core index']
  #allocation1 [shape = 'u32[144,128]{1,0:T(1,128)}', space=vmem, size = 0x12000, scoped, tag = 'internal scratch']
  #allocation2 [shape = 'f32[1,1]{1,0:T(1,128)S(6)}', space=smem, size = 0x200, scoped, tag = 'scoped memory for tpu_custom_call.1']
  %s0 = inlined_call_operand.hbm [shape: f32[16,24], index: 0, kind: input, shape index: {}]
  %s1 = inlined_call_operand.hbm [shape: f32[24,128], index: 1, kind: input, shape index: {}]
  %s2 = inlined_call_operand.<no memory space> [shape: f32[1,1], index: 2, kind: input, shape index: {}]
  %s3 = inlined_call_operand.hbm [shape: f32[16,128], index: 3, kind: output, shape index: {}]
  %s4 = sld [smem:[#allocation0]]
  $region30: #{tpu_custom_call.1} parent=0
    _
  %s6 = ssub.s32 1, %s4
  %s7 = scalar_select 0, %s6, %s4
  %8 = sst [smem:[#allocation2]] %s2
  $region1: #{tpu_custom_call.1} parent=0
    #allocation3 [shape = 'u8[8192]{0}', space=vmem, size = 0x2000, scoped, tag = 'input window, operand 0, single buffered']
    #allocation4 [shape = 's32[1]{0}', space=sflag, size = 0x4, scoped, tag = 'scoped memory for tpu_custom_call.1']
    #allocation5 [shape = 's32[1]{0}', space=sflag, size = 0x4, scoped, tag = 'scoped memory for tpu_custom_call.1']
    #allocation6 [shape = 'u8[12288]{0}', space=vmem, size = 0x3000, scoped, tag = 'input window, operand 1, single buffered']
    #allocation7 [shape = 's32[1]{0}', space=sflag, size = 0x4, scoped, tag = 'scoped memory for tpu_custom_call.1']
    #allocation8 [shape = 'u8[8192]{0}', space=vmem, size = 0x2000, scoped, tag = 'output window, operand 0, single buffered']
    %9 = vsyncpa [#allocation4], 0
    %10 = vsyncpa [#allocation7], 0
    %11 = vsyncpa [#allocation5], 0
    // Predicated region
    $region2: #{tpu_custom_call.1} parent=1 // pred_check
      _
    $region3: #{tpu_custom_call.1} parent=1 // pred_check_branch
      %13 = sbr.rel (0) target = $region5
    $region4: #{tpu_custom_call.1} parent=1 // pred_region
      %s15 = ssub.s32 256, 256
      %16 = vsyncadd [#allocation4], %s15
      %s17 = sshll.u32 [#allocation3], 4
      %s18 = int_to_ptr.vmem [resolvable:$true] %s17
      %23 = dma.hbm_to_vmem [thread:$0]  %s0, 256, %s18, [#allocation4], 128, 128, 8
    $region5: #{tpu_custom_call.1} parent=1 // pred_fallthru
      _
    // Predicated region
    $region6: #{tpu_custom_call.1} parent=1 // pred_check
      _
    $region7: #{tpu_custom_call.1} parent=1 // pred_check_branch
      %25 = sbr.rel (0) target = $region9
    $region8: #{tpu_custom_call.1} parent=1 // pred_region
      %s27 = ssub.s32 384, 384
      %28 = vsyncadd [#allocation7], %s27
      %s29 = sshll.u32 [#allocation6], 4
      %s30 = int_to_ptr.vmem [resolvable:$true] %s29
      %35 = dma.hbm_to_vmem [thread:$0]  %s1, 384, %s30, [#allocation7], 128, 128, 8
    $region9: #{tpu_custom_call.1} parent=1 // pred_fallthru
      _
    // Predicated region
    $region10: #{tpu_custom_call.1} parent=1 // pred_check
      _
    $region11: #{tpu_custom_call.1} parent=1 // pred_check_branch
      %37 = sbr.rel (0) target = $region13
    $region12: #{tpu_custom_call.1} parent=1 // pred_region
      _
    $region13: #{tpu_custom_call.1} parent=1 // pred_fallthru
      _
    // Predicated region
    $region14: #{tpu_custom_call.1} parent=1 // pred_check
      _
    $region15: #{tpu_custom_call.1} parent=1 // pred_check_branch
      %39 = sbr.rel (0) target = $region17
    $region16: #{tpu_custom_call.1} parent=1 // pred_region
      %40 = dma.done [#allocation4], 256
    $region17: #{tpu_custom_call.1} parent=1 // pred_fallthru
      _
    // Predicated region
    $region18: #{tpu_custom_call.1} parent=1 // pred_check
      _
    $region19: #{tpu_custom_call.1} parent=1 // pred_check_branch
      %42 = sbr.rel (0) target = $region21
    $region20: #{tpu_custom_call.1} parent=1 // pred_region
      %43 = dma.done [#allocation7], 384
    $region21: #{tpu_custom_call.1} parent=1 // pred_fallthru
      _
    %v44 = vld [vmem:[#allocation3] sm:$0xff]
    %v45 = vld [vmem:[#allocation3 + $0x8] sm:$0xff]
    %v46 = vld [vmem:[#allocation6] sm:$0xff]
    %v47 = vld [vmem:[#allocation6 + $0x8] sm:$0xff]
    %v48 = vld [vmem:[#allocation6 + $0x10] sm:$0xff]
    %s49 = sld [smem:[#allocation2]]
    %v50 = vstv %s49
    %vm51 = vcmask 195584
    %v53 = vsel %vm51, %v44, 0
    %v56 = vsel %vm51, %v45, 0
    %58 = vmatprep.subr.mxu0 0.0
    %59 = vmatpush1.msra.mxu0 %v46
    %60 = vmatprep.subr.mxu0 0.0
    %61 = vmatpush1.msra.mxu0 %v47
    %62 = vmatprep.subr.mxu0 0.0
    %63 = vmatpush1.msra.mxu0 %v48
    %64 = vmatprep.subr.mxu0 0.0
    %65 = vmatpush1.msra.mxu0 0.0
    %66 = vmatprep.subr.mxu0 0.0
    %67 = vmatpush1.msra.mxu0 0.0
    %68 = vmatprep.subr.mxu0 0.0
    %69 = vmatpush1.msra.mxu0 0.0
    %70 = vmatprep.subr.mxu0 0.0
    %71 = vmatpush1.msra.mxu0 0.0
    %72 = vmatprep.subr.mxu0 0.0
    %73 = vmatpush1.msra.mxu0 0.0
    %74 = vmatprep.subr.mxu0 0.0
    %75 = vmatpush1.msra.mxu0 0.0
    %76 = vmatprep.subr.mxu0 0.0
    %77 = vmatpush1.msra.mxu0 0.0
    %78 = vmatprep.subr.mxu0 0.0
    %79 = vmatpush1.msra.mxu0 0.0
    %80 = vmatprep.subr.mxu0 0.0
    %81 = vmatpush1.msra.mxu0 0.0
    %82 = vmatprep.subr.mxu0 0.0
    %83 = vmatpush1.msra.mxu0 0.0
    %84 = vmatprep.subr.mxu0 0.0
    %85 = vmatpush1.msra.mxu0 0.0
    %86 = vmatprep.subr.mxu0 0.0
    %87 = vmatpush1.msra.mxu0 0.0
    %88 = vmatprep.subr.mxu0 0.0
    %89 = vmatpush1.msra.mxu0 0.0
    %90 = vmatprep.subr.mxu0 0.0
    %91 = vmatpush1.msra.mxu0 0.0
    %92 = vmatprep.subr.mxu0 0.0
    %93 = vmatpush1.msra.mxu0 0.0
    %94 = vmatprep.subr.mxu0 0.0
    %95 = vmatpush1.msra.mxu0 0.0
    %96 = vmatprep.subr.mxu0 0.0
    %97 = vmatpush1.msra.mxu0 0.0
    %98 = vmatprep.subr.mxu0 0.0
    %99 = vmatpush1.msra.mxu0 0.0
    %100 = vmatprep.subr.mxu0 0.0
    %101 = vmatpush1.msra.mxu0 0.0
    %102 = vmatprep.subr.mxu0 0.0
    %103 = vmatpush1.msra.mxu0 0.0
    %104 = vmatprep.subr.mxu0 0.0
    %105 = vmatpush1.msra.mxu0 0.0
    %106 = vmatprep.subr.mxu0 0.0
    %107 = vmatpush1.msra.mxu0 0.0
    %108 = vmatprep.subr.mxu0 0.0
    %109 = vmatpush1.msra.mxu0 0.0
    %110 = vmatprep.subr.mxu0 0.0
    %111 = vmatpush1.msra.mxu0 0.0
    %112 = vmatprep.subr.mxu0 0.0
    %113 = vmatpush1.msra.mxu0 0.0
    %114 = vmatprep.subr.mxu0 0.0
    %115 = vmatpush1.msra.mxu0 0.0
    %116 = vmatprep.subr.mxu0 0.0
    %117 = vmatpush1.msra.mxu0 0.0
    %118 = vmatprep.subr.mxu0 0.0
    %119 = vmatpush1.msra.mxu0 0.0
    %120 = vmatprep.subr.mxu0 0.0
    %121 = vmatpush1.msra.mxu0 0.0
    %122 = vmatprep.mubr.f32.mxu0 0.0
    %123 = vmatmul.mubr.f32.gmra.mrb[0].mxu0 %v53
    %v124 = vpop.f32.mrb[0].mxu0
    %v125 = vadd.f32 %v50, %v124
    %v126 = vpop.f32.mrb[0].mxu0
    %127 = vmatprep.mubr.f32.mxu0 0.0
    %128 = vmatmul.mubr.f32.gmra.mrb[0].mxu0 %v56
    %v129 = vpop.f32.mrb[0].mxu0
    %v130 = vadd.f32 %v50, %v129
    %v131 = vpop.f32.mrb[0].mxu0
    %132 = vdwg.mxu0
    %133 = vst [vmem:[#allocation8] sm:$0xff] %v125
    %134 = vst [vmem:[#allocation8 + $0x8] sm:$0xff] %v130
    // Predicated region
    $region22: #{tpu_custom_call.1} parent=1 // pred_check
      _
    $region23: #{tpu_custom_call.1} parent=1 // pred_check_branch
      %136 = sbr.rel (0) target = $region25
    $region24: #{tpu_custom_call.1} parent=1 // pred_region
      %s138 = ssub.s32 256, 256
      %139 = vsyncadd [#allocation5], %s138
      %s140 = sshll.u32 [#allocation8], 4
      %s141 = int_to_ptr.vmem [resolvable:$true] %s140
      %146 = dma.vmem_to_hbm [thread:$0]  %s141, 256, %s3, [#allocation5], 128, 128, 8
    $region25: #{tpu_custom_call.1} parent=1 // pred_fallthru
      _
    // Predicated region
    $region26: #{tpu_custom_call.1} parent=1 // pred_check
      _
    $region27: #{tpu_custom_call.1} parent=1 // pred_check_branch
      %148 = sbr.rel (0) target = $region29
    $region28: #{tpu_custom_call.1} parent=1 // pred_region
      %149 = dma.done [#allocation5], 256
    $region29: #{tpu_custom_call.1} parent=1 // pred_fallthru
      _
    %150 = vsyncpa [#allocation4], 1
    %151 = vsyncpa [#allocation7], 1
    %152 = vsyncpa [#allocation5], 1

</llo_original>
